<compile_context>
chip_gen: v6e
topology: v6e:2x2x1
jax: 0.10.0
libtpu: 0.0.40
codegen_flags: <defaults>
</compile_context>

<pallas_src>
import jax
import jax.numpy as jnp
from jax.experimental import pallas as pl
from jax.experimental.pallas import tpu as pltpu


def _round_up(n, m):
    return ((n + m - 1) // m) * m


def fourier_head_kernel(wts_ref,     # (L,)  f32  SMEM (scalar prefetch): branch weights / total
                        x_ref,       # (TB, D_in)        VMEM, f32
                        w1_ref,      # (D_in, L*Hp)      VMEM, matmul dtype
                        b1_ref,      # (1, L*Hp)         VMEM, f32
                        w2_ref,      # (L, Hp, D_out_p)  VMEM, matmul dtype
                        b2_ref,      # (L, 1, D_out_p)   VMEM, f32 (-1e30 in padded cols)
                        o_ref):      # (TB, D_out_p)     VMEM, f32
    levels = w2_ref.shape[0]
    hidden = w2_ref.shape[1]         # per-branch (lane-aligned, zero-padded) width

    x = x_ref[...]
    # One fused first-layer matmul across all branches (single MXU pass).
    h = jnp.dot(x.astype(w1_ref.dtype), w1_ref[...],
                preferred_element_type=jnp.float32)
    h = jnp.maximum(h + b1_ref[...], 0.0)            # (TB, L*Hp), f32

    acc = jnp.zeros(o_ref.shape, jnp.float32)
    for level in range(levels):                      # static unroll; levels is small
        hl = h[:, level * hidden:(level + 1) * hidden]           # (TB, Hp)
        logits = jnp.dot(hl.astype(w2_ref.dtype), w2_ref[level],
                         preferred_element_type=jnp.float32) + b2_ref[level]
        # LogSoftmax(dim=1): exp/log hit the EUP slot, VPU stays light.
        m = jnp.max(logits, axis=-1, keepdims=True)
        s = logits - m
        lse = jnp.log(jnp.sum(jnp.exp(s), axis=-1, keepdims=True))
        acc = acc + wts_ref[level] * (s - lse)       # branch weight read from SMEM
    o_ref[...] = acc                                 # single lane-dense store


def fourier_head_forward(x, W1, b1, W2, b2, branch_weights,
                         *, matmul_dtype=jnp.float32, block_b=256):
    """x: (B, ...) NCHW-style tensor (flattened to (B, D_in));
       W1: (L, D_in, H); b1: (L, H); W2: (L, H, D_out); b2: (L, D_out)
       (hidden units beyond each branch's bottleneck are zero-padded);
       branch_weights: (L,) f32, already divided by total_weight."""
    B = x.shape[0]
    x_flat = x.reshape(B, -1).astype(jnp.float32)    # Flatten()
    L, D_in, H = W1.shape
    D_out = W2.shape[-1]

    # ---- host-side packing / padding (layout plumbing, done once) -----------
    H_pad = _round_up(H, 128)                        # lane-aligned per-branch chunk
    D_out_pad = _round_up(D_out, 128)                # lane-dense output slab
    B_pad = _round_up(B, 8)                          # f32 sublane alignment
    TB = _round_up(min(block_b, B_pad), 8)           # batch tile (parallel axis)
    B_pad = _round_up(B_pad, TB)

    xp = jnp.zeros((B_pad, D_in), jnp.float32).at[:B, :].set(x_flat)

    # Concatenate per-branch first-layer weights -> one wide matmul operand.
    W1_pad = jnp.zeros((L, D_in, H_pad), jnp.float32).at[:, :, :H].set(W1)
    W1_cat = jnp.transpose(W1_pad, (1, 0, 2)).reshape(D_in, L * H_pad)
    b1_cat = jnp.zeros((L, H_pad), jnp.float32).at[:, :H].set(b1).reshape(1, L * H_pad)

    # Pad D_out to 128 lanes; padded logit columns get a huge negative bias so
    # they never affect max / logsumexp (their W2 columns are zero).
    NEG = jnp.float32(-1e30)
    W2_pad = jnp.zeros((L, H_pad, D_out_pad), jnp.float32).at[:, :H, :D_out].set(W2)
    b2_pad = jnp.full((L, 1, D_out_pad), NEG, jnp.float32).at[:, 0, :D_out].set(b2)

    # Cast matmul operands host-side (halves weight DMA bytes in the bf16 path);
    # biases / activations-after-matmul stay f32.
    W1_in = W1_cat.astype(matmul_dtype)
    W2_in = W2_pad.astype(matmul_dtype)

    grid = (B_pad // TB,)
    out = pl.pallas_call(
        fourier_head_kernel,
        out_shape=jax.ShapeDtypeStruct((B_pad, D_out_pad), jnp.float32),
        grid_spec=pltpu.PrefetchScalarGridSpec(
            num_scalar_prefetch=1,                   # branch weights -> SMEM
            grid=grid,
            in_specs=[
                pl.BlockSpec((TB, D_in), lambda b, w: (b, 0)),
                pl.BlockSpec((D_in, L * H_pad), lambda b, w: (0, 0)),
                pl.BlockSpec((1, L * H_pad), lambda b, w: (0, 0)),
                pl.BlockSpec((L, H_pad, D_out_pad), lambda b, w: (0, 0, 0)),
                pl.BlockSpec((L, 1, D_out_pad), lambda b, w: (0, 0, 0)),
            ],
            out_specs=pl.BlockSpec((TB, D_out_pad), lambda b, w: (b, 0)),
        ),
        compiler_params=pltpu.CompilerParams(
            # Single parallel batch-tile axis: megacore shards it on v7x; the
            # level reduction is fully fused inside one step.
            dimension_semantics=("parallel",)),
    )(branch_weights.astype(jnp.float32), xp, W1_in, b1_cat, W2_in, b2_pad)

    return out[:B, :D_out]


def make_params(key, D_in, H, D_out, levels, weight_decay=2.0):
    """Deterministic per-branch params, hidden-dim zero-padded to width H."""
    W1 = jnp.zeros((levels, D_in, H), jnp.float32)
    b1 = jnp.zeros((levels, H), jnp.float32)
    W2 = jnp.zeros((levels, H, D_out), jnp.float32)
    b2 = jnp.zeros((levels, D_out), jnp.float32)
    weights, total_weight = [], 0.0
    for level in range(levels):
        w = weight_decay ** (-level)
        total_weight += w
        weights.append(w)
        bottleneck = int(H / 2 ** (levels - level - 1))
        key, k1, k2, k3, k4 = jax.random.split(key, 5)
        lim1 = 1.0 / (D_in ** 0.5)
        lim2 = 1.0 / (bottleneck ** 0.5)
        W1 = W1.at[level, :, :bottleneck].set(
            jax.random.uniform(k1, (D_in, bottleneck), jnp.float32, -lim1, lim1))
        b1 = b1.at[level, :bottleneck].set(
            jax.random.uniform(k2, (bottleneck,), jnp.float32, -lim1, lim1))
        W2 = W2.at[level, :bottleneck, :].set(
            jax.random.uniform(k3, (bottleneck, D_out), jnp.float32, -lim2, lim2))
        b2 = b2.at[level, :].set(
            jax.random.uniform(k4, (D_out,), jnp.float32, -lim2, lim2))
    branch_weights = jnp.asarray(weights, jnp.float32) / jnp.float32(total_weight)
    return W1, b1, W2, b2, branch_weights


def reference_forward(x_flat, W1, b1, W2, b2, branch_weights):
    """Pure-JAX reference mirroring the PyTorch forward (eval mode)."""
    y = jnp.zeros((x_flat.shape[0], W2.shape[-1]), jnp.float32)
    for level in range(W1.shape[0]):
        h = jnp.maximum(x_flat @ W1[level] + b1[level], 0.0)
        logits = h @ W2[level] + b2[level]
        y = y + branch_weights[level] * jax.nn.log_softmax(logits, axis=1)
    return y


if __name__ == "__main__":
    # NCHW input (2, 4, 8, 8) -> Flatten() -> D_in = 256 (lane-aligned K).
    B, C, Hs, Ws = 2, 4, 8, 8
    D_in = C * Hs * Ws
    H = 32           # widest bottleneck
    D_out = 10
    levels = 3       # bottlenecks: 8, 16, 32

    key = jax.random.PRNGKey(0)
    key, kx = jax.random.split(key)
    x = jax.random.normal(kx, (B, C, Hs, Ws), jnp.float32)

    W1, b1, W2, b2, branch_weights = make_params(key, D_in, H, D_out, levels)
    ref = reference_forward(x.reshape(B, -1), W1, b1, W2, b2, branch_weights)

    # Exact path: f32 matmul operands.
    out = fourier_head_forward(x, W1, b1, W2, b2, branch_weights)
    out = jax.block_until_ready(out)
    assert out.shape == (B, D_out)
    assert jnp.allclose(out, ref, atol=1e-5, rtol=1e-5), "f32 kernel mismatch"

    # v6e/v7x MXU path: bf16 matmul operands, f32 accumulate + f32 softmax.
    out_bf16 = fourier_head_forward(x, W1, b1, W2, b2, branch_weights,
                                    matmul_dtype=jnp.bfloat16)
    out_bf16 = jax.block_until_ready(out_bf16)
    assert jnp.allclose(out_bf16, ref, atol=5e-2, rtol=5e-2), "bf16 kernel mismatch"

    print("KERNEL_OK")
</pallas_src>

<mosaic_0001>
module attributes {stable_mosaic.version = 11 : i64} {
  func.func @fourier_head_kernel(%arg0: i32, %arg1: memref<3xf32, #tpu.memory_space<smem>>, %arg2: memref<8x256xf32, #tpu.memory_space<vmem>>, %arg3: memref<256x384xf32, #tpu.memory_space<vmem>>, %arg4: memref<1x384xf32, #tpu.memory_space<vmem>>, %arg5: memref<3x128x128xf32, #tpu.memory_space<vmem>>, %arg6: memref<3x1x128xf32, #tpu.memory_space<vmem>>, %arg7: memref<8x128xf32, #tpu.memory_space<vmem>>) attributes {dimension_semantics = [#tpu.dimension_semantics<parallel>], iteration_bounds = array<i64: 1>, scalar_prefetch = 1 : i64, scratch_operands = 0 : i64, tpu.core_type = #tpu.core_type<tc>, window_params = [{transform_indices = @transform_0, window_bounds = array<i64: 8, 256>}, {pipeline_mode = #tpu.pipeline_mode<synchronous>, transform_indices = @transform_1, window_bounds = array<i64: 256, 384>}, {pipeline_mode = #tpu.pipeline_mode<synchronous>, transform_indices = @transform_2, window_bounds = array<i64: 1, 384>}, {pipeline_mode = #tpu.pipeline_mode<synchronous>, transform_indices = @transform_3, window_bounds = array<i64: 3, 128, 128>}, {pipeline_mode = #tpu.pipeline_mode<synchronous>, transform_indices = @transform_4, window_bounds = array<i64: 3, 1, 128>}, {transform_indices = @transform_5, window_bounds = array<i64: 8, 128>}]} {
    %c0 = arith.constant 0 : index
    %c0_0 = arith.constant 0 : index
    %0 = vector.load %arg2[%c0, %c0_0] : memref<8x256xf32, #tpu.memory_space<vmem>>, vector<8x256xf32>
    %c0_1 = arith.constant 0 : index
    %c0_2 = arith.constant 0 : index
    %1 = vector.load %arg3[%c0_1, %c0_2] : memref<256x384xf32, #tpu.memory_space<vmem>>, vector<256x384xf32>
    %cst = arith.constant dense<0.000000e+00> : vector<8x384xf32>
    %2 = tpu.matmul %0, %1, %cst {dimension_numbers = #tpu.dot_dimension_numbers<[1], [0], [0], [1], [0, 0, 1, 1], [], []>} : vector<8x256xf32>, vector<256x384xf32>, vector<8x384xf32> -> vector<8x384xf32>
    %c0_3 = arith.constant 0 : index
    %c0_4 = arith.constant 0 : index
    %3 = vector.load %arg4[%c0_3, %c0_4] : memref<1x384xf32, #tpu.memory_space<vmem>>, vector<1x384xf32>
    %4 = vector.broadcast %3 : vector<1x384xf32> to vector<8x384xf32>
    %5 = arith.addf %2, %4 : vector<8x384xf32>
    %cst_5 = arith.constant 0.000000e+00 : f32
    %6 = vector.broadcast %cst_5 : f32 to vector<8x384xf32>
    %7 = arith.maximumf %5, %6 : vector<8x384xf32>
    %cst_6 = arith.constant 0.000000e+00 : f32
    %8 = vector.broadcast %cst_6 : f32 to vector<8x128xf32>
    %9 = vector.extract_strided_slice %7 {offsets = [0, 0], sizes = [8, 128], strides = [1, 1]} : vector<8x384xf32> to vector<8x128xf32>
    %c0_7 = arith.constant 0 : index
    %c0_8 = arith.constant 0 : index
    %c0_9 = arith.constant 0 : index
    %10 = vector.load %arg5[%c0_7, %c0_8, %c0_9] : memref<3x128x128xf32, #tpu.memory_space<vmem>>, vector<1x128x128xf32>
    %11 = vector.shape_cast %10 : vector<1x128x128xf32> to vector<128x128xf32>
    %cst_10 = arith.constant dense<0.000000e+00> : vector<8x128xf32>
    %12 = tpu.matmul %9, %11, %cst_10 {dimension_numbers = #tpu.dot_dimension_numbers<[1], [0], [0], [1], [0, 0, 1, 1], [], []>} : vector<8x128xf32>, vector<128x128xf32>, vector<8x128xf32> -> vector<8x128xf32>
    %c0_11 = arith.constant 0 : index
    %c0_12 = arith.constant 0 : index
    %c0_13 = arith.constant 0 : index
    %13 = vector.load %arg6[%c0_11, %c0_12, %c0_13] : memref<3x1x128xf32, #tpu.memory_space<vmem>>, vector<1x1x128xf32>
    %14 = vector.shape_cast %13 : vector<1x1x128xf32> to vector<1x128xf32>
    %15 = vector.broadcast %14 : vector<1x128xf32> to vector<8x128xf32>
    %16 = arith.addf %12, %15 : vector<8x128xf32>
    %cst_14 = arith.constant dense<0xFF800000> : vector<8xf32>
    %17 = vector.multi_reduction <maximumf>, %16, %cst_14 [1] : vector<8x128xf32> to vector<8xf32>
    %18 = vector.shape_cast %17 : vector<8xf32> to vector<8x1xf32>
    %19 = vector.broadcast %18 : vector<8x1xf32> to vector<8x128xf32>
    %20 = arith.subf %16, %19 : vector<8x128xf32>
    %21 = math.exp %20 : vector<8x128xf32>
    %cst_15 = arith.constant dense<0.000000e+00> : vector<8xf32>
    %22 = vector.multi_reduction <add>, %21, %cst_15 [1] : vector<8x128xf32> to vector<8xf32>
    %23 = vector.shape_cast %22 : vector<8xf32> to vector<8x1xf32>
    %24 = math.log %23 : vector<8x1xf32>
    %c0_16 = arith.constant 0 : index
    %25 = memref.load %arg1[%c0_16] : memref<3xf32, #tpu.memory_space<smem>>
    %26 = vector.broadcast %24 : vector<8x1xf32> to vector<8x128xf32>
    %27 = arith.subf %20, %26 : vector<8x128xf32>
    %28 = vector.broadcast %25 : f32 to vector<8x128xf32>
    %29 = arith.mulf %28, %27 : vector<8x128xf32>
    %30 = arith.addf %8, %29 : vector<8x128xf32>
    %31 = vector.extract_strided_slice %7 {offsets = [0, 128], sizes = [8, 128], strides = [1, 1]} : vector<8x384xf32> to vector<8x128xf32>
    %c1 = arith.constant 1 : index
    %c0_17 = arith.constant 0 : index
    %c0_18 = arith.constant 0 : index
    %32 = vector.load %arg5[%c1, %c0_17, %c0_18] : memref<3x128x128xf32, #tpu.memory_space<vmem>>, vector<1x128x128xf32>
    %33 = vector.shape_cast %32 : vector<1x128x128xf32> to vector<128x128xf32>
    %cst_19 = arith.constant dense<0.000000e+00> : vector<8x128xf32>
    %34 = tpu.matmul %31, %33, %cst_19 {dimension_numbers = #tpu.dot_dimension_numbers<[1], [0], [0], [1], [0, 0, 1, 1], [], []>} : vector<8x128xf32>, vector<128x128xf32>, vector<8x128xf32> -> vector<8x128xf32>
    %c1_20 = arith.constant 1 : index
    %c0_21 = arith.constant 0 : index
    %c0_22 = arith.constant 0 : index
    %35 = vector.load %arg6[%c1_20, %c0_21, %c0_22] : memref<3x1x128xf32, #tpu.memory_space<vmem>>, vector<1x1x128xf32>
    %36 = vector.shape_cast %35 : vector<1x1x128xf32> to vector<1x128xf32>
    %37 = vector.broadcast %36 : vector<1x128xf32> to vector<8x128xf32>
    %38 = arith.addf %34, %37 : vector<8x128xf32>
    %cst_23 = arith.constant dense<0xFF800000> : vector<8xf32>
    %39 = vector.multi_reduction <maximumf>, %38, %cst_23 [1] : vector<8x128xf32> to vector<8xf32>
    %40 = vector.shape_cast %39 : vector<8xf32> to vector<8x1xf32>
    %41 = vector.broadcast %40 : vector<8x1xf32> to vector<8x128xf32>
    %42 = arith.subf %38, %41 : vector<8x128xf32>
    %43 = math.exp %42 : vector<8x128xf32>
    %cst_24 = arith.constant dense<0.000000e+00> : vector<8xf32>
    %44 = vector.multi_reduction <add>, %43, %cst_24 [1] : vector<8x128xf32> to vector<8xf32>
    %45 = vector.shape_cast %44 : vector<8xf32> to vector<8x1xf32>
    %46 = math.log %45 : vector<8x1xf32>
    %c1_25 = arith.constant 1 : index
    %47 = memref.load %arg1[%c1_25] : memref<3xf32, #tpu.memory_space<smem>>
    %48 = vector.broadcast %46 : vector<8x1xf32> to vector<8x128xf32>
    %49 = arith.subf %42, %48 : vector<8x128xf32>
    %50 = vector.broadcast %47 : f32 to vector<8x128xf32>
    %51 = arith.mulf %50, %49 : vector<8x128xf32>
    %52 = arith.addf %30, %51 : vector<8x128xf32>
    %53 = vector.extract_strided_slice %7 {offsets = [0, 256], sizes = [8, 128], strides = [1, 1]} : vector<8x384xf32> to vector<8x128xf32>
    %c2 = arith.constant 2 : index
    %c0_26 = arith.constant 0 : index
    %c0_27 = arith.constant 0 : index
    %54 = vector.load %arg5[%c2, %c0_26, %c0_27] : memref<3x128x128xf32, #tpu.memory_space<vmem>>, vector<1x128x128xf32>
    %55 = vector.shape_cast %54 : vector<1x128x128xf32> to vector<128x128xf32>
    %cst_28 = arith.constant dense<0.000000e+00> : vector<8x128xf32>
    %56 = tpu.matmul %53, %55, %cst_28 {dimension_numbers = #tpu.dot_dimension_numbers<[1], [0], [0], [1], [0, 0, 1, 1], [], []>} : vector<8x128xf32>, vector<128x128xf32>, vector<8x128xf32> -> vector<8x128xf32>
    %c2_29 = arith.constant 2 : index
    %c0_30 = arith.constant 0 : index
    %c0_31 = arith.constant 0 : index
    %57 = vector.load %arg6[%c2_29, %c0_30, %c0_31] : memref<3x1x128xf32, #tpu.memory_space<vmem>>, vector<1x1x128xf32>
    %58 = vector.shape_cast %57 : vector<1x1x128xf32> to vector<1x128xf32>
    %59 = vector.broadcast %58 : vector<1x128xf32> to vector<8x128xf32>
    %60 = arith.addf %56, %59 : vector<8x128xf32>
    %cst_32 = arith.constant dense<0xFF800000> : vector<8xf32>
    %61 = vector.multi_reduction <maximumf>, %60, %cst_32 [1] : vector<8x128xf32> to vector<8xf32>
    %62 = vector.shape_cast %61 : vector<8xf32> to vector<8x1xf32>
    %63 = vector.broadcast %62 : vector<8x1xf32> to vector<8x128xf32>
    %64 = arith.subf %60, %63 : vector<8x128xf32>
    %65 = math.exp %64 : vector<8x128xf32>
    %cst_33 = arith.constant dense<0.000000e+00> : vector<8xf32>
    %66 = vector.multi_reduction <add>, %65, %cst_33 [1] : vector<8x128xf32> to vector<8xf32>
    %67 = vector.shape_cast %66 : vector<8xf32> to vector<8x1xf32>
    %68 = math.log %67 : vector<8x1xf32>
    %c2_34 = arith.constant 2 : index
    %69 = memref.load %arg1[%c2_34] : memref<3xf32, #tpu.memory_space<smem>>
    %70 = vector.broadcast %68 : vector<8x1xf32> to vector<8x128xf32>
    %71 = arith.subf %64, %70 : vector<8x128xf32>
    %72 = vector.broadcast %69 : f32 to vector<8x128xf32>
    %73 = arith.mulf %72, %71 : vector<8x128xf32>
    %74 = arith.addf %52, %73 : vector<8x128xf32>
    %c0_35 = arith.constant 0 : index
    %c0_36 = arith.constant 0 : index
    %75 = vector.load %arg7[%c0_35, %c0_36] : memref<8x128xf32, #tpu.memory_space<vmem>>, vector<8x128xf32>
    tpu.vector_store %arg7[%c0_35, %c0_36], %74 {strides = array<i32>} : memref<8x128xf32, #tpu.memory_space<vmem>>, vector<8x128xf32>,
    return
  }
  func.func @transform_0(%arg0: i32, %arg1: memref<3xf32, #tpu.memory_space<smem>>) -> (i32, i32) {
    %c0_i32 = arith.constant 0 : i32
    %c0_i32_0 = arith.constant 0 : i32
    return %arg0, %c0_i32 : i32, i32
  }
  func.func @transform_1(%arg0: i32, %arg1: memref<3xf32, #tpu.memory_space<smem>>) -> (i32, i32) {
    %c0_i32 = arith.constant 0 : i32
    %c0_i32_0 = arith.constant 0 : i32
    %c0_i32_1 = arith.constant 0 : i32
    return %c0_i32, %c0_i32_0 : i32, i32
  }
  func.func @transform_2(%arg0: i32, %arg1: memref<3xf32, #tpu.memory_space<smem>>) -> (i32, i32) {
    %c0_i32 = arith.constant 0 : i32
    %c0_i32_0 = arith.constant 0 : i32
    %c0_i32_1 = arith.constant 0 : i32
    return %c0_i32, %c0_i32_0 : i32, i32
  }
  func.func @transform_3(%arg0: i32, %arg1: memref<3xf32, #tpu.memory_space<smem>>) -> (i32, i32, i32) {
    %c0_i32 = arith.constant 0 : i32
    %c0_i32_0 = arith.constant 0 : i32
    %c0_i32_1 = arith.constant 0 : i32
    %c0_i32_2 = arith.constant 0 : i32
    return %c0_i32, %c0_i32_0, %c0_i32_1 : i32, i32, i32
  }
  func.func @transform_4(%arg0: i32, %arg1: memref<3xf32, #tpu.memory_space<smem>>) -> (i32, i32, i32) {
    %c0_i32 = arith.constant 0 : i32
    %c0_i32_0 = arith.constant 0 : i32
    %c0_i32_1 = arith.constant 0 : i32
    %c0_i32_2 = arith.constant 0 : i32
    return %c0_i32, %c0_i32_0, %c0_i32_1 : i32, i32, i32
  }
  func.func @transform_5(%arg0: i32, %arg1: memref<3xf32, #tpu.memory_space<smem>>) -> (i32, i32) {
    %c0_i32 = arith.constant 0 : i32
    %c0_i32_0 = arith.constant 0 : i32
    return %arg0, %c0_i32 : i32, i32
  }
}

</mosaic_0001>

<llo_original>
// kernel: tpu_custom_call.1
$region0: #{tpu_custom_call.1}
  #allocation0 [shape = 'u32[]', space=smem, size = 0x4, offset = 0x4, fixed_abs, tag = 'smem constant byte address 0x4 - core index']
  #allocation1 [shape = 'u32[144,128]{1,0:T(1,128)}', space=vmem, size = 0x12000, scoped, tag = 'internal scratch']
  #allocation2 [shape = 's32[1]{0}', space=sflag, size = 0x4, scoped, tag = 'scoped memory for tpu_custom_call.1']
  #allocation3 [shape = 'u8[512]{0}', space=smem, size = 0x200, scoped, tag = 'prefetched SMEM operand 0']
  %s0 = inlined_call_operand.hbm [shape: f32[3], index: 0, kind: input, shape index: {}]
  %s1 = inlined_call_operand.hbm [shape: f32[8,256], index: 1, kind: input, shape index: {}]
  %s2 = inlined_call_operand.hbm [shape: f32[256,384], index: 2, kind: input, shape index: {}]
  %s3 = inlined_call_operand.vmem [shape: f32[1,384], index: 3, kind: input, shape index: {}]
  %s4 = inlined_call_operand.hbm [shape: f32[3,128,128], index: 4, kind: input, shape index: {}]
  %s5 = inlined_call_operand.vmem [shape: f32[3,1,128], index: 5, kind: input, shape index: {}]
  %s6 = inlined_call_operand.hbm [shape: f32[8,128], index: 6, kind: output, shape index: {}]
  %s7 = sld [smem:[#allocation0]]
  $region42: #{tpu_custom_call.1} parent=0
    _
  %s9 = ssub.s32 1, %s7
  %s10 = scalar_select 0, %s9, %s7
  %12 = dma.hbm_to_smem %s0, 16, [#allocation3], [#allocation2]
  %13 = dma.done [#allocation2], 16
  %14 = sfence
  $region1: #{tpu_custom_call.1} parent=0
    #allocation4 [shape = 'u8[8192]{0}', space=vmem, size = 0x2000, scoped, tag = 'input window, operand 1, single buffered']
    #allocation5 [shape = 's32[1]{0}', space=sflag, size = 0x4, scoped, tag = 'scoped memory for tpu_custom_call.1']
    #allocation6 [shape = 's32[1]{0}', space=sflag, size = 0x4, scoped, tag = 'scoped memory for tpu_custom_call.1']
    #allocation7 [shape = 'u8[393216]{0}', space=vmem, size = 0x60000, scoped, tag = 'input window, operand 2, single buffered']
    #allocation8 [shape = 's32[1]{0}', space=sflag, size = 0x4, scoped, tag = 'scoped memory for tpu_custom_call.1']
    #allocation9 [shape = 'u8[196608]{0}', space=vmem, size = 0x30000, scoped, tag = 'input window, operand 4, single buffered']
    #allocation10 [shape = 'u8[4096]{0}', space=vmem, size = 0x1000, scoped, tag = 'output window, operand 0, single buffered']
    %15 = vsyncpa [#allocation5], 0
    %16 = vsyncpa [#allocation8], 0
    %17 = vsyncpa [#allocation6], 0
    // Predicated region
    $region2: #{tpu_custom_call.1} parent=1 // pred_check
      _
    $region3: #{tpu_custom_call.1} parent=1 // pred_check_branch
      %19 = sbr.rel (0) target = $region5
    $region4: #{tpu_custom_call.1} parent=1 // pred_region
      %s21 = ssub.s32 256, 256
      %22 = vsyncadd [#allocation5], %s21
      %s24 = sshll.u32 [#allocation4], 4
      %s25 = int_to_ptr.vmem [resolvable:$true] %s24
      %27 = dma.hbm_to_vmem [thread:$0]  %s1, 256, %s25, [#allocation5]
    $region5: #{tpu_custom_call.1} parent=1 // pred_fallthru
      _
    // Predicated region
    $region6: #{tpu_custom_call.1} parent=1 // pred_check
      _
    $region7: #{tpu_custom_call.1} parent=1 // pred_check_branch
      %29 = sbr.rel (0) target = $region9
    $region8: #{tpu_custom_call.1} parent=1 // pred_region
      %s31 = ssub.s32 12288, 12288
      %32 = vsyncadd [#allocation8], %s31
      %s33 = sshll.u32 [#allocation7], 4
      %s34 = int_to_ptr.vmem [resolvable:$true] %s33
      %39 = dma.hbm_to_vmem [thread:$0]  %s2, 12288, %s34, [#allocation8], 384, 384, 24
    $region9: #{tpu_custom_call.1} parent=1 // pred_fallthru
      _
    // Predicated region
    $region10: #{tpu_custom_call.1} parent=1 // pred_check
      _
    $region11: #{tpu_custom_call.1} parent=1 // pred_check_branch
      %41 = sbr.rel (0) target = $region13
    $region12: #{tpu_custom_call.1} parent=1 // pred_region
      _
    $region13: #{tpu_custom_call.1} parent=1 // pred_fallthru
      _
    // Predicated region
    $region14: #{tpu_custom_call.1} parent=1 // pred_check
      _
    $region15: #{tpu_custom_call.1} parent=1 // pred_check_branch
      %43 = sbr.rel (0) target = $region17
    $region16: #{tpu_custom_call.1} parent=1 // pred_region
      %s45 = ssub.s32 6144, 6144
      %46 = vsyncadd [#allocation8], %s45
      %s47 = sshll.u32 [#allocation9], 4
      %s48 = int_to_ptr.vmem [resolvable:$true] %s47
      %53 = dma.hbm_to_vmem [thread:$0]  %s4, 6144, %s48, [#allocation8], 128, 128, 8
    $region17: #{tpu_custom_call.1} parent=1 // pred_fallthru
      _
    // Predicated region
    $region18: #{tpu_custom_call.1} parent=1 // pred_check
      _
    $region19: #{tpu_custom_call.1} parent=1 // pred_check_branch
      %55 = sbr.rel (0) target = $region21
    $region20: #{tpu_custom_call.1} parent=1 // pred_region
      _
    $region21: #{tpu_custom_call.1} parent=1 // pred_fallthru
      _
    // Predicated region
    $region22: #{tpu_custom_call.1} parent=1 // pred_check
      _
    $region23: #{tpu_custom_call.1} parent=1 // pred_check_branch
      %57 = sbr.rel (0) target = $region25
    $region24: #{tpu_custom_call.1} parent=1 // pred_region
      %58 = dma.done [#allocation5], 256
    $region25: #{tpu_custom_call.1} parent=1 // pred_fallthru
      _
    // Predicated region
    $region26: #{tpu_custom_call.1} parent=1 // pred_check
      _
    $region27: #{tpu_custom_call.1} parent=1 // pred_check_branch
      %60 = sbr.rel (0) target = $region29
    $region28: #{tpu_custom_call.1} parent=1 // pred_region
      %61 = dma.done [#allocation8], 12288
    $region29: #{tpu_custom_call.1} parent=1 // pred_fallthru
      _
    // Predicated region
    $region30: #{tpu_custom_call.1} parent=1 // pred_check
      _
    $region31: #{tpu_custom_call.1} parent=1 // pred_check_branch
      %63 = sbr.rel (0) target = $region33
    $region32: #{tpu_custom_call.1} parent=1 // pred_region
      %64 = dma.done [#allocation8], 6144
    $region33: #{tpu_custom_call.1} parent=1 // pred_fallthru
      _
    %v65 = vld [vmem:[#allocation4] sm:$0xff]
    %v66 = vld [vmem:[#allocation4 + $0x8] sm:$0xff]
    %v67 = vld [vmem:[#allocation7] sm:$0xff]
    %v68 = vld [vmem:[#allocation7 + $0x8] sm:$0xff]
    %v69 = vld [vmem:[#allocation7 + $0x10] sm:$0xff]
    %v70 = vld [vmem:[#allocation7 + $0x18] sm:$0xff]
    %v71 = vld [vmem:[#allocation7 + $0x20] sm:$0xff]
    %v72 = vld [vmem:[#allocation7 + $0x28] sm:$0xff]
    %v73 = vld [vmem:[#allocation7 + $0x30] sm:$0xff]
    %v74 = vld [vmem:[#allocation7 + $0x38] sm:$0xff]
    %v75 = vld [vmem:[#allocation7 + $0x40] sm:$0xff]
    %v76 = vld [vmem:[#allocation7 + $0x48] sm:$0xff]
    %v77 = vld [vmem:[#allocation7 + $0x50] sm:$0xff]
    %v78 = vld [vmem:[#allocation7 + $0x58] sm:$0xff]
    %v79 = vld [vmem:[#allocation7 + $0x60] sm:$0xff]
    %v80 = vld [vmem:[#allocation7 + $0x68] sm:$0xff]
    %v81 = vld [vmem:[#allocation7 + $0x70] sm:$0xff]
    %v82 = vld [vmem:[#allocation7 + $0x78] sm:$0xff]
    %v83 = vld [vmem:[#allocation7 + $0x80] sm:$0xff]
    %v84 = vld [vmem:[#allocation7 + $0x88] sm:$0xff]
    %v85 = vld [vmem:[#allocation7 + $0x90] sm:$0xff]
    %v86 = vld [vmem:[#allocation7 + $0x98] sm:$0xff]
    %v87 = vld [vmem:[#allocation7 + $0xa0] sm:$0xff]
    %v88 = vld [vmem:[#allocation7 + $0xa8] sm:$0xff]
    %v89 = vld [vmem:[#allocation7 + $0xb0] sm:$0xff]
    %v90 = vld [vmem:[#allocation7 + $0xb8] sm:$0xff]
    %v91 = vld [vmem:[#allocation7 + $0xc0] sm:$0xff]
    %v92 = vld [vmem:[#allocation7 + $0xc8] sm:$0xff]
    %v93 = vld [vmem:[#allocation7 + $0xd0] sm:$0xff]
    %v94 = vld [vmem:[#allocation7 + $0xd8] sm:$0xff]
    %v95 = vld [vmem:[#allocation7 + $0xe0] sm:$0xff]
    %v96 = vld [vmem:[#allocation7 + $0xe8] sm:$0xff]
    %v97 = vld [vmem:[#allocation7 + $0xf0] sm:$0xff]
    %v98 = vld [vmem:[#allocation7 + $0xf8] sm:$0xff]
    %v99 = vld [vmem:[#allocation7 + $0x100] sm:$0xff]
    %v100 = vld [vmem:[#allocation7 + $0x108] sm:$0xff]
    %v101 = vld [vmem:[#allocation7 + $0x110] sm:$0xff]
    %v102 = vld [vmem:[#allocation7 + $0x118] sm:$0xff]
    %v103 = vld [vmem:[#allocation7 + $0x120] sm:$0xff]
    %v104 = vld [vmem:[#allocation7 + $0x128] sm:$0xff]
    %v105 = vld [vmem:[#allocation7 + $0x130] sm:$0xff]
    %v106 = vld [vmem:[#allocation7 + $0x138] sm:$0xff]
    %v107 = vld [vmem:[#allocation7 + $0x140] sm:$0xff]
    %v108 = vld [vmem:[#allocation7 + $0x148] sm:$0xff]
    %v109 = vld [vmem:[#allocation7 + $0x150] sm:$0xff]
    %v110 = vld [vmem:[#allocation7 + $0x158] sm:$0xff]
    %v111 = vld [vmem:[#allocation7 + $0x160] sm:$0xff]
    %v112 = vld [vmem:[#allocation7 + $0x168] sm:$0xff]
    %v113 = vld [vmem:[#allocation7 + $0x170] sm:$0xff]
    %v114 = vld [vmem:[#allocation7 + $0x178] sm:$0xff]
    %v115 = vld [vmem:[#allocation7 + $0x180] sm:$0xff]
    %v116 = vld [vmem:[#allocation7 + $0x188] sm:$0xff]
    %v117 = vld [vmem:[#allocation7 + $0x190] sm:$0xff]
    %v118 = vld [vmem:[#allocation7 + $0x198] sm:$0xff]
    %v119 = vld [vmem:[#allocation7 + $0x1a0] sm:$0xff]
    %v120 = vld [vmem:[#allocation7 + $0x1a8] sm:$0xff]
    %v121 = vld [vmem:[#allocation7 + $0x1b0] sm:$0xff]
    %v122 = vld [vmem:[#allocation7 + $0x1b8] sm:$0xff]
    %v123 = vld [vmem:[#allocation7 + $0x1c0] sm:$0xff]
    %v124 = vld [vmem:[#allocation7 + $0x1c8] sm:$0xff]
    %v125 = vld [vmem:[#allocation7 + $0x1d0] sm:$0xff]
    %v126 = vld [vmem:[#allocation7 + $0x1d8] sm:$0xff]
    %v127 = vld [vmem:[#allocation7 + $0x1e0] sm:$0xff]
    %v128 = vld [vmem:[#allocation7 + $0x1e8] sm:$0xff]
    %v129 = vld [vmem:[#allocation7 + $0x1f0] sm:$0xff]
    %v130 = vld [vmem:[#allocation7 + $0x1f8] sm:$0xff]
    %v131 = vld [vmem:[#allocation7 + $0x200] sm:$0xff]
    %v132 = vld [vmem:[#allocation7 + $0x208] sm:$0xff]
    %v133 = vld [vmem:[#allocation7 + $0x210] sm:$0xff]
    %v134 = vld [vmem:[#allocation7 + $0x218] sm:$0xff]
    %v135 = vld [vmem:[#allocation7 + $0x220] sm:$0xff]
    %v136 = vld [vmem:[#allocation7 + $0x228] sm:$0xff]
    %v137 = vld [vmem:[#allocation7 + $0x230] sm:$0xff]
    %v138 = vld [vmem:[#allocation7 + $0x238] sm:$0xff]
    %v139 = vld [vmem:[#allocation7 + $0x240] sm:$0xff]
    %v140 = vld [vmem:[#allocation7 + $0x248] sm:$0xff]
    %v141 = vld [vmem:[#allocation7 + $0x250] sm:$0xff]
    %v142 = vld [vmem:[#allocation7 + $0x258] sm:$0xff]
    %v143 = vld [vmem:[#allocation7 + $0x260] sm:$0xff]
    %v144 = vld [vmem:[#allocation7 + $0x268] sm:$0xff]
    %v145 = vld [vmem:[#allocation7 + $0x270] sm:$0xff]
    %v146 = vld [vmem:[#allocation7 + $0x278] sm:$0xff]
    %v147 = vld [vmem:[#allocation7 + $0x280] sm:$0xff]
    %v148 = vld [vmem:[#allocation7 + $0x288] sm:$0xff]
    %v149 = vld [vmem:[#allocation7 + $0x290] sm:$0xff]
    %v150 = vld [vmem:[#allocation7 + $0x298] sm:$0xff]
    %v151 = vld [vmem:[#allocation7 + $0x2a0] sm:$0xff]
    %v152 = vld [vmem:[#allocation7 + $0x2a8] sm:$0xff]
    %v153 = vld [vmem:[#allocation7 + $0x2b0] sm:$0xff]
    %v154 = vld [vmem:[#allocation7 + $0x2b8] sm:$0xff]
    %v155 = vld [vmem:[#allocation7 + $0x2c0] sm:$0xff]
    %v156 = vld [vmem:[#allocation7 + $0x2c8] sm:$0xff]
    %v157 = vld [vmem:[#allocation7 + $0x2d0] sm:$0xff]
    %v158 = vld [vmem:[#allocation7 + $0x2d8] sm:$0xff]
    %v159 = vld [vmem:[#allocation7 + $0x2e0] sm:$0xff]
    %v160 = vld [vmem:[#allocation7 + $0x2e8] sm:$0xff]
    %v161 = vld [vmem:[#allocation7 + $0x2f0] sm:$0xff]
    %v162 = vld [vmem:[#allocation7 + $0x2f8] sm:$0xff]
    %v163 = vld [vmem:[%s3] sm:$0x7]
    %v165 = vlaneseq
    %v166 = vshrl.u32 %v165, 7
    %v167 = vsub.s32 0, %v166
    %v168 = vrot.slane %v163, %v167
    %v169 = vlaneseq
    %v170 = vshrl.u32 %v169, 7
    %v171 = vsub.s32 1, %v170
    %v172 = vrot.slane %v163, %v171
    %v173 = vlaneseq
    %v174 = vshrl.u32 %v173, 7
    %v175 = vsub.s32 2, %v174
    %v176 = vrot.slane %v163, %v175
    %180 = vmatprep.subr.mxu0 %v113
    %181 = vmatpush1.msra.mxu0 %v112
    %182 = vmatprep.subr.mxu0 %v110
    %183 = vmatpush1.msra.mxu0 %v109
    %184 = vmatprep.subr.mxu0 %v107
    %185 = vmatpush1.msra.mxu0 %v106
    %186 = vmatprep.subr.mxu0 %v104
    %187 = vmatpush1.msra.mxu0 %v103
    %188 = vmatprep.subr.mxu0 %v101
    %189 = vmatpush1.msra.mxu0 %v100
    %190 = vmatprep.subr.mxu0 %v98
    %191 = vmatpush1.msra.mxu0 %v97
    %192 = vmatprep.subr.mxu0 %v95
    %193 = vmatpush1.msra.mxu0 %v94
    %194 = vmatprep.subr.mxu0 %v92
    %195 = vmatpush1.msra.mxu0 %v91
    %196 = vmatprep.subr.mxu0 %v89
    %197 = vmatpush1.msra.mxu0 %v88
    %198 = vmatprep.subr.mxu0 %v86
    %199 = vmatpush1.msra.mxu0 %v85
    %200 = vmatprep.subr.mxu0 %v83
    %201 = vmatpush1.msra.mxu0 %v82
    %202 = vmatprep.subr.mxu0 %v80
    %203 = vmatpush1.msra.mxu0 %v79
    %204 = vmatprep.subr.mxu0 %v77
    %205 = vmatpush1.msra.mxu0 %v76
    %206 = vmatprep.subr.mxu0 %v74
    %207 = vmatpush1.msra.mxu0 %v73
    %208 = vmatprep.subr.mxu0 %v71
    %209 = vmatpush1.msra.mxu0 %v70
    %210 = vmatprep.subr.mxu0 %v68
    %211 = vmatpush1.msra.mxu0 %v67
    %212 = vmatprep.subr.mxu0 %v161
    %213 = vmatpush2.msra.mxu0 %v160
    %214 = vmatprep.subr.mxu0 %v158
    %215 = vmatpush2.msra.mxu0 %v157
    %216 = vmatprep.subr.mxu0 %v155
    %217 = vmatpush2.msra.mxu0 %v154
    %218 = vmatprep.subr.mxu0 %v152
    %219 = vmatpush2.msra.mxu0 %v151
    %220 = vmatprep.subr.mxu0 %v149
    %221 = vmatpush2.msra.mxu0 %v148
    %222 = vmatprep.subr.mxu0 %v146
    %223 = vmatpush2.msra.mxu0 %v145
    %224 = vmatprep.subr.mxu0 %v143
    %225 = vmatpush2.msra.mxu0 %v142
    %226 = vmatprep.subr.mxu0 %v140
    %227 = vmatpush2.msra.mxu0 %v139
    %228 = vmatprep.subr.mxu0 %v137
    %229 = vmatpush2.msra.mxu0 %v136
    %230 = vmatprep.subr.mxu0 %v134
    %231 = vmatpush2.msra.mxu0 %v133
    %232 = vmatprep.subr.mxu0 %v131
    %233 = vmatpush2.msra.mxu0 %v130
    %234 = vmatprep.subr.mxu0 %v128
    %235 = vmatpush2.msra.mxu0 %v127
    %236 = vmatprep.subr.mxu0 %v125
    %237 = vmatpush2.msra.mxu0 %v124
    %238 = vmatprep.subr.mxu0 %v122
    %239 = vmatpush2.msra.mxu0 %v121
    %240 = vmatprep.subr.mxu0 %v119
    %241 = vmatpush2.msra.mxu0 %v118
    %242 = vmatprep.subr.mxu0 %v116
    %243 = vmatpush2.msra.mxu0 %v115
    %244 = vmatprep.mubr.f32.mxu0 %v66
    %245 = vmatmul.mubr.f32.gmra.mxu0 %v65
    %v246 = vpop.f32.mrf.mxu0
    %v247 = vadd.f32 %v168, %v246
    %v248 = vpop.f32.mrf.mxu0
    %v249 = vadd.f32 %v172, %v248
    %250 = vdwg.mxu0
    %251 = vmatprep.subr.mxu0 0.0
    %252 = vmatpush1.msra.mxu0 %v114
    %253 = vmatprep.subr.mxu0 0.0
    %254 = vmatpush1.msra.mxu0 %v111
    %255 = vmatprep.subr.mxu0 0.0
    %256 = vmatpush1.msra.mxu0 %v108
    %257 = vmatprep.subr.mxu0 0.0
    %258 = vmatpush1.msra.mxu0 %v105
    %259 = vmatprep.subr.mxu0 0.0
    %260 = vmatpush1.msra.mxu0 %v102
    %261 = vmatprep.subr.mxu0 0.0
    %262 = vmatpush1.msra.mxu0 %v99
    %263 = vmatprep.subr.mxu0 0.0
    %264 = vmatpush1.msra.mxu0 %v96
    %265 = vmatprep.subr.mxu0 0.0
    %266 = vmatpush1.msra.mxu0 %v93
    %267 = vmatprep.subr.mxu0 0.0
    %268 = vmatpush1.msra.mxu0 %v90
    %269 = vmatprep.subr.mxu0 0.0
    %270 = vmatpush1.msra.mxu0 %v87
    %271 = vmatprep.subr.mxu0 0.0
    %272 = vmatpush1.msra.mxu0 %v84
    %273 = vmatprep.subr.mxu0 0.0
    %274 = vmatpush1.msra.mxu0 %v81
    %275 = vmatprep.subr.mxu0 0.0
    %276 = vmatpush1.msra.mxu0 %v78
    %277 = vmatprep.subr.mxu0 0.0
    %278 = vmatpush1.msra.mxu0 %v75
    %279 = vmatprep.subr.mxu0 0.0
    %280 = vmatpush1.msra.mxu0 %v72
    %281 = vmatprep.subr.mxu0 0.0
    %282 = vmatpush1.msra.mxu0 %v69
    %283 = vmatprep.subr.mxu0 0.0
    %284 = vmatpush2.msra.mxu0 %v162
    %285 = vmatprep.subr.mxu0 0.0
    %286 = vmatpush2.msra.mxu0 %v159
    %287 = vmatprep.subr.mxu0 0.0
    %288 = vmatpush2.msra.mxu0 %v156
    %289 = vmatprep.subr.mxu0 0.0
    %290 = vmatpush2.msra.mxu0 %v153
    %291 = vmatprep.subr.mxu0 0.0
    %292 = vmatpush2.msra.mxu0 %v150
    %293 = vmatprep.subr.mxu0 0.0
    %294 = vmatpush2.msra.mxu0 %v147
    %295 = vmatprep.subr.mxu0 0.0
    %296 = vmatpush2.msra.mxu0 %v144
    %297 = vmatprep.subr.mxu0 0.0
    %298 = vmatpush2.msra.mxu0 %v141
    %299 = vmatprep.subr.mxu0 0.0
    %300 = vmatpush2.msra.mxu0 %v138
    %301 = vmatprep.subr.mxu0 0.0
    %302 = vmatpush2.msra.mxu0 %v135
    %303 = vmatprep.subr.mxu0 0.0
    %304 = vmatpush2.msra.mxu0 %v132
    %305 = vmatprep.subr.mxu0 0.0
    %306 = vmatpush2.msra.mxu0 %v129
    %307 = vmatprep.subr.mxu0 0.0
    %308 = vmatpush2.msra.mxu0 %v126
    %309 = vmatprep.subr.mxu0 0.0
    %310 = vmatpush2.msra.mxu0 %v123
    %311 = vmatprep.subr.mxu0 0.0
    %312 = vmatpush2.msra.mxu0 %v120
    %313 = vmatprep.subr.mxu0 0.0
    %314 = vmatpush2.msra.mxu0 %v117
    %315 = vmatprep.mubr.f32.mxu0 %v66
    %316 = vmatmul.mubr.f32.gmra.mxu0 %v65
    %v317 = vpop.f32.mrf.mxu0
    %v318 = vadd.f32 %v176, %v317
    %v319 = vpop.f32.mrf.mxu0
    %320 = vdwg.mxu0
    %v321 = vmax.f32 %v247, 0.0
    %v322 = vmax.f32 %v249, 0.0
    %v323 = vmax.f32 %v318, 0.0
    %v324 = vld [vmem:[#allocation9] sm:$0xff]
    %v325 = vld [vmem:[#allocation9 + $0x8] sm:$0xff]
    %v326 = vld [vmem:[#allocation9 + $0x10] sm:$0xff]
    %v327 = vld [vmem:[#allocation9 + $0x18] sm:$0xff]
    %v328 = vld [vmem:[#allocation9 + $0x20] sm:$0xff]
    %v329 = vld [vmem:[#allocation9 + $0x28] sm:$0xff]
    %v330 = vld [vmem:[#allocation9 + $0x30] sm:$0xff]
    %v331 = vld [vmem:[#allocation9 + $0x38] sm:$0xff]
    %v332 = vld [vmem:[#allocation9 + $0x40] sm:$0xff]
    %v333 = vld [vmem:[#allocation9 + $0x48] sm:$0xff]
    %v334 = vld [vmem:[#allocation9 + $0x50] sm:$0xff]
    %v335 = vld [vmem:[#allocation9 + $0x58] sm:$0xff]
    %v336 = vld [vmem:[#allocation9 + $0x60] sm:$0xff]
    %v337 = vld [vmem:[#allocation9 + $0x68] sm:$0xff]
    %v338 = vld [vmem:[#allocation9 + $0x70] sm:$0xff]
    %v339 = vld [vmem:[#allocation9 + $0x78] sm:$0xff]
    %v340 = vld [vmem:[%s5] sm:$0x1]
    %v342 = vlaneseq
    %v343 = vshrl.u32 %v342, 7
    %v344 = vsub.s32 0, %v343
    %v345 = vrot.slane %v340, %v344
    %347 = vmatprep.subr.mxu0 0.0
    %348 = vmatpush1.msra.mxu0 %v339
    %349 = vmatprep.subr.mxu0 0.0
    %350 = vmatpush1.msra.mxu0 %v338
    %351 = vmatprep.subr.mxu0 0.0
    %352 = vmatpush1.msra.mxu0 %v337
    %353 = vmatprep.subr.mxu0 0.0
    %354 = vmatpush1.msra.mxu0 %v336
    %355 = vmatprep.subr.mxu0 0.0
    %356 = vmatpush1.msra.mxu0 %v335
    %357 = vmatprep.subr.mxu0 0.0
    %358 = vmatpush1.msra.mxu0 %v334
    %359 = vmatprep.subr.mxu0 0.0
    %360 = vmatpush1.msra.mxu0 %v333
    %361 = vmatprep.subr.mxu0 0.0
    %362 = vmatpush1.msra.mxu0 %v332
    %363 = vmatprep.subr.mxu0 0.0
    %364 = vmatpush1.msra.mxu0 %v331
    %365 = vmatprep.subr.mxu0 0.0
    %366 = vmatpush1.msra.mxu0 %v330
    %367 = vmatprep.subr.mxu0 0.0
    %368 = vmatpush1.msra.mxu0 %v329
    %369 = vmatprep.subr.mxu0 0.0
    %370 = vmatpush1.msra.mxu0 %v328
    %371 = vmatprep.subr.mxu0 0.0
    %372 = vmatpush1.msra.mxu0 %v327
    %373 = vmatprep.subr.mxu0 0.0
    %374 = vmatpush1.msra.mxu0 %v326
    %375 = vmatprep.subr.mxu0 0.0
    %376 = vmatpush1.msra.mxu0 %v325
    %377 = vmatprep.subr.mxu0 0.0
    %378 = vmatpush1.msra.mxu0 %v324
    %379 = vmatprep.subr.mxu0 0.0
    %380 = vmatpush2.msra.mxu0 0.0
    %381 = vmatprep.subr.mxu0 0.0
    %382 = vmatpush2.msra.mxu0 0.0
    %383 = vmatprep.subr.mxu0 0.0
    %384 = vmatpush2.msra.mxu0 0.0
    %385 = vmatprep.subr.mxu0 0.0
    %386 = vmatpush2.msra.mxu0 0.0
    %387 = vmatprep.subr.mxu0 0.0
    %388 = vmatpush2.msra.mxu0 0.0
    %389 = vmatprep.subr.mxu0 0.0
    %390 = vmatpush2.msra.mxu0 0.0
    %391 = vmatprep.subr.mxu0 0.0
    %392 = vmatpush2.msra.mxu0 0.0
    %393 = vmatprep.subr.mxu0 0.0
    %394 = vmatpush2.msra.mxu0 0.0
    %395 = vmatprep.subr.mxu0 0.0
    %396 = vmatpush2.msra.mxu0 0.0
    %397 = vmatprep.subr.mxu0 0.0
    %398 = vmatpush2.msra.mxu0 0.0
    %399 = vmatprep.subr.mxu0 0.0
    %400 = vmatpush2.msra.mxu0 0.0
    %401 = vmatprep.subr.mxu0 0.0
    %402 = vmatpush2.msra.mxu0 0.0
    %403 = vmatprep.subr.mxu0 0.0
    %404 = vmatpush2.msra.mxu0 0.0
    %405 = vmatprep.subr.mxu0 0.0
    %406 = vmatpush2.msra.mxu0 0.0
    %407 = vmatprep.subr.mxu0 0.0
    %408 = vmatpush2.msra.mxu0 0.0
    %409 = vmatprep.subr.mxu0 0.0
    %410 = vmatpush2.msra.mxu0 0.0
    %411 = vmatprep.mubr.f32.mxu0 0.0
    %412 = vmatmul.mubr.f32.gmra.mxu0 %v321
    %v413 = vpop.f32.mrf.mxu0
    %v414 = vadd.f32 %v345, %v413
    %v415 = vpop.f32.mrf.mxu0
    %416 = vdwg.mxu0
    %417 = vmax.xlane.f32.xlu0 %v414
    %v418 = vpop.xlane.xlu0 %417
    %v419 = vsub.f32 %v414, %v418
    %v420 = vmul.f32 %v419, 1.442695
    %v421 = vpow.pop %v420
    %422 = vadd.xlane.f32.xlu0 %v421
    %v423 = vpop.xlane.xlu0 %422
    %v424 = vlog2.pop %v423
    %v425 = vmul.f32 %v424, 0.6931472
    %s426 = sld [smem:[#allocation3]]
    %v427 = vsub.f32 %v419, %v425
    %v428 = vstv %s426
    %v429 = vmul.f32 %v428, %v427
    %v430 = vadd.f32 %v429, 0.0
    %s431 = scalar_lea.vmem [#allocation9], 128
    %v432 = vld [vmem:[%s431] sm:$0xff]
    %v433 = vld [vmem:[%s431 + $0x8] sm:$0xff]
    %v434 = vld [vmem:[%s431 + $0x10] sm:$0xff]
    %v435 = vld [vmem:[%s431 + $0x18] sm:$0xff]
    %v436 = vld [vmem:[%s431 + $0x20] sm:$0xff]
    %v437 = vld [vmem:[%s431 + $0x28] sm:$0xff]
    %v438 = vld [vmem:[%s431 + $0x30] sm:$0xff]
    %v439 = vld [vmem:[%s431 + $0x38] sm:$0xff]
    %v440 = vld [vmem:[%s431 + $0x40] sm:$0xff]
    %v441 = vld [vmem:[%s431 + $0x48] sm:$0xff]
    %v442 = vld [vmem:[%s431 + $0x50] sm:$0xff]
    %v443 = vld [vmem:[%s431 + $0x58] sm:$0xff]
    %v444 = vld [vmem:[%s431 + $0x60] sm:$0xff]
    %v445 = vld [vmem:[%s431 + $0x68] sm:$0xff]
    %v446 = vld [vmem:[%s431 + $0x70] sm:$0xff]
    %v447 = vld [vmem:[%s431 + $0x78] sm:$0xff]
    %s448 = scalar_lea.vmem %s5, 1
    %v449 = vld [vmem:[%s448] sm:$0x1]
    %v451 = vlaneseq
    %v452 = vshrl.u32 %v451, 7
    %v453 = vsub.s32 0, %v452
    %v454 = vrot.slane %v449, %v453
    %456 = vmatprep.subr.mxu0 0.0
    %457 = vmatpush1.msra.mxu0 %v447
    %458 = vmatprep.subr.mxu0 0.0
    %459 = vmatpush1.msra.mxu0 %v446
    %460 = vmatprep.subr.mxu0 0.0
    %461 = vmatpush1.msra.mxu0 %v445
    %462 = vmatprep.subr.mxu0 0.0
    %463 = vmatpush1.msra.mxu0 %v444
    %464 = vmatprep.subr.mxu0 0.0
    %465 = vmatpush1.msra.mxu0 %v443
    %466 = vmatprep.subr.mxu0 0.0
    %467 = vmatpush1.msra.mxu0 %v442
    %468 = vmatprep.subr.mxu0 0.0
    %469 = vmatpush1.msra.mxu0 %v441
    %470 = vmatprep.subr.mxu0 0.0
    %471 = vmatpush1.msra.mxu0 %v440
    %472 = vmatprep.subr.mxu0 0.0
    %473 = vmatpush1.msra.mxu0 %v439
    %474 = vmatprep.subr.mxu0 0.0
    %475 = vmatpush1.msra.mxu0 %v438
    %476 = vmatprep.subr.mxu0 0.0
    %477 = vmatpush1.msra.mxu0 %v437
    %478 = vmatprep.subr.mxu0 0.0
    %479 = vmatpush1.msra.mxu0 %v436
    %480 = vmatprep.subr.mxu0 0.0
    %481 = vmatpush1.msra.mxu0 %v435
    %482 = vmatprep.subr.mxu0 0.0
    %483 = vmatpush1.msra.mxu0 %v434
    %484 = vmatprep.subr.mxu0 0.0
    %485 = vmatpush1.msra.mxu0 %v433
    %486 = vmatprep.subr.mxu0 0.0
    %487 = vmatpush1.msra.mxu0 %v432
    %488 = vmatprep.subr.mxu0 0.0
    %489 = vmatpush2.msra.mxu0 0.0
    %490 = vmatprep.subr.mxu0 0.0
    %491 = vmatpush2.msra.mxu0 0.0
    %492 = vmatprep.subr.mxu0 0.0
    %493 = vmatpush2.msra.mxu0 0.0
    %494 = vmatprep.subr.mxu0 0.0
    %495 = vmatpush2.msra.mxu0 0.0
    %496 = vmatprep.subr.mxu0 0.0
    %497 = vmatpush2.msra.mxu0 0.0
    %498 = vmatprep.subr.mxu0 0.0
    %499 = vmatpush2.msra.mxu0 0.0
    %500 = vmatprep.subr.mxu0 0.0
    %501 = vmatpush2.msra.mxu0 0.0
    %502 = vmatprep.subr.mxu0 0.0
    %503 = vmatpush2.msra.mxu0 0.0
    %504 = vmatprep.subr.mxu0 0.0
    %505 = vmatpush2.msra.mxu0 0.0
    %506 = vmatprep.subr.mxu0 0.0
    %507 = vmatpush2.msra.mxu0 0.0
    %508 = vmatprep.subr.mxu0 0.0
    %509 = vmatpush2.msra.mxu0 0.0
    %510 = vmatprep.subr.mxu0 0.0
    %511 = vmatpush2.msra.mxu0 0.0
    %512 = vmatprep.subr.mxu0 0.0
    %513 = vmatpush2.msra.mxu0 0.0
    %514 = vmatprep.subr.mxu0 0.0
    %515 = vmatpush2.msra.mxu0 0.0
    %516 = vmatprep.subr.mxu0 0.0
    %517 = vmatpush2.msra.mxu0 0.0
    %518 = vmatprep.subr.mxu0 0.0
    %519 = vmatpush2.msra.mxu0 0.0
    %520 = vmatprep.mubr.f32.mxu0 0.0
    %521 = vmatmul.mubr.f32.gmra.mxu0 %v322
    %v522 = vpop.f32.mrf.mxu0
    %v523 = vadd.f32 %v454, %v522
    %v524 = vpop.f32.mrf.mxu0
    %525 = vdwg.mxu0
    %526 = vmax.xlane.f32.xlu0 %v523
    %v527 = vpop.xlane.xlu0 %526
    %v528 = vsub.f32 %v523, %v527
    %v529 = vmul.f32 %v528, 1.442695
    %v530 = vpow.pop %v529
    %531 = vadd.xlane.f32.xlu0 %v530
    %v532 = vpop.xlane.xlu0 %531
    %v533 = vlog2.pop %v532
    %v534 = vmul.f32 %v533, 0.6931472
    %s535 = sld [smem:[#allocation3 + $0x1]]
    %v536 = vsub.f32 %v528, %v534
    %v537 = vstv %s535
    %v538 = vmul.f32 %v537, %v536
    %v539 = vadd.f32 %v430, %v538
    %s540 = scalar_lea.vmem [#allocation9], 256
    %v541 = vld [vmem:[%s540] sm:$0xff]
    %v542 = vld [vmem:[%s540 + $0x8] sm:$0xff]
    %v543 = vld [vmem:[%s540 + $0x10] sm:$0xff]
    %v544 = vld [vmem:[%s540 + $0x18] sm:$0xff]
    %v545 = vld [vmem:[%s540 + $0x20] sm:$0xff]
    %v546 = vld [vmem:[%s540 + $0x28] sm:$0xff]
    %v547 = vld [vmem:[%s540 + $0x30] sm:$0xff]
    %v548 = vld [vmem:[%s540 + $0x38] sm:$0xff]
    %v549 = vld [vmem:[%s540 + $0x40] sm:$0xff]
    %v550 = vld [vmem:[%s540 + $0x48] sm:$0xff]
    %v551 = vld [vmem:[%s540 + $0x50] sm:$0xff]
    %v552 = vld [vmem:[%s540 + $0x58] sm:$0xff]
    %v553 = vld [vmem:[%s540 + $0x60] sm:$0xff]
    %v554 = vld [vmem:[%s540 + $0x68] sm:$0xff]
    %v555 = vld [vmem:[%s540 + $0x70] sm:$0xff]
    %v556 = vld [vmem:[%s540 + $0x78] sm:$0xff]
    %s557 = scalar_lea.vmem %s5, 2
    %v558 = vld [vmem:[%s557] sm:$0x1]
    %v560 = vlaneseq
    %v561 = vshrl.u32 %v560, 7
    %v562 = vsub.s32 0, %v561
    %v563 = vrot.slane %v558, %v562
    %565 = vmatprep.subr.mxu0 0.0
    %566 = vmatpush1.msra.mxu0 %v556
    %567 = vmatprep.subr.mxu0 0.0
    %568 = vmatpush1.msra.mxu0 %v555
    %569 = vmatprep.subr.mxu0 0.0
    %570 = vmatpush1.msra.mxu0 %v554
    %571 = vmatprep.subr.mxu0 0.0
    %572 = vmatpush1.msra.mxu0 %v553
    %573 = vmatprep.subr.mxu0 0.0
    %574 = vmatpush1.msra.mxu0 %v552
    %575 = vmatprep.subr.mxu0 0.0
    %576 = vmatpush1.msra.mxu0 %v551
    %577 = vmatprep.subr.mxu0 0.0
    %578 = vmatpush1.msra.mxu0 %v550
    %579 = vmatprep.subr.mxu0 0.0
    %580 = vmatpush1.msra.mxu0 %v549
    %581 = vmatprep.subr.mxu0 0.0
    %582 = vmatpush1.msra.mxu0 %v548
    %583 = vmatprep.subr.mxu0 0.0
    %584 = vmatpush1.msra.mxu0 %v547
    %585 = vmatprep.subr.mxu0 0.0
    %586 = vmatpush1.msra.mxu0 %v546
    %587 = vmatprep.subr.mxu0 0.0
    %588 = vmatpush1.msra.mxu0 %v545
    %589 = vmatprep.subr.mxu0 0.0
    %590 = vmatpush1.msra.mxu0 %v544
    %591 = vmatprep.subr.mxu0 0.0
    %592 = vmatpush1.msra.mxu0 %v543
    %593 = vmatprep.subr.mxu0 0.0
    %594 = vmatpush1.msra.mxu0 %v542
    %595 = vmatprep.subr.mxu0 0.0
    %596 = vmatpush1.msra.mxu0 %v541
    %597 = vmatprep.subr.mxu0 0.0
    %598 = vmatpush2.msra.mxu0 0.0
    %599 = vmatprep.subr.mxu0 0.0
    %600 = vmatpush2.msra.mxu0 0.0
    %601 = vmatprep.subr.mxu0 0.0
    %602 = vmatpush2.msra.mxu0 0.0
    %603 = vmatprep.subr.mxu0 0.0
    %604 = vmatpush2.msra.mxu0 0.0
    %605 = vmatprep.subr.mxu0 0.0
    %606 = vmatpush2.msra.mxu0 0.0
    %607 = vmatprep.subr.mxu0 0.0
    %608 = vmatpush2.msra.mxu0 0.0
    %609 = vmatprep.subr.mxu0 0.0
    %610 = vmatpush2.msra.mxu0 0.0
    %611 = vmatprep.subr.mxu0 0.0
    %612 = vmatpush2.msra.mxu0 0.0
    %613 = vmatprep.subr.mxu0 0.0
    %614 = vmatpush2.msra.mxu0 0.0
    %615 = vmatprep.subr.mxu0 0.0
    %616 = vmatpush2.msra.mxu0 0.0
    %617 = vmatprep.subr.mxu0 0.0
    %618 = vmatpush2.msra.mxu0 0.0
    %619 = vmatprep.subr.mxu0 0.0
    %620 = vmatpush2.msra.mxu0 0.0
    %621 = vmatprep.subr.mxu0 0.0
    %622 = vmatpush2.msra.mxu0 0.0
    %623 = vmatprep.subr.mxu0 0.0
    %624 = vmatpush2.msra.mxu0 0.0
    %625 = vmatprep.subr.mxu0 0.0
    %626 = vmatpush2.msra.mxu0 0.0
    %627 = vmatprep.subr.mxu0 0.0
    %628 = vmatpush2.msra.mxu0 0.0
    %629 = vmatprep.mubr.f32.mxu0 0.0
    %630 = vmatmul.mubr.f32.gmra.mxu0 %v323
    %v631 = vpop.f32.mrf.mxu0
    %v632 = vadd.f32 %v563, %v631
    %v633 = vpop.f32.mrf.mxu0
    %634 = vdwg.mxu0
    %635 = vmax.xlane.f32.xlu0 %v632
    %v636 = vpop.xlane.xlu0 %635
    %v637 = vsub.f32 %v632, %v636
    %v638 = vmul.f32 %v637, 1.442695
    %v639 = vpow.pop %v638
    %640 = vadd.xlane.f32.xlu0 %v639
    %v641 = vpop.xlane.xlu0 %640
    %v642 = vlog2.pop %v641
    %v643 = vmul.f32 %v642, 0.6931472
    %s644 = sld [smem:[#allocation3 + $0x2]]
    %v645 = vsub.f32 %v637, %v643
    %v646 = vstv %s644
    %v647 = vmul.f32 %v646, %v645
    %v648 = vadd.f32 %v539, %v647
    %649 = vst [vmem:[#allocation10] sm:$0xff] %v648
    // Predicated region
    $region34: #{tpu_custom_call.1} parent=1 // pred_check
      _
    $region35: #{tpu_custom_call.1} parent=1 // pred_check_branch
      %651 = sbr.rel (0) target = $region37
    $region36: #{tpu_custom_call.1} parent=1 // pred_region
      %s653 = ssub.s32 128, 128
      %654 = vsyncadd [#allocation6], %s653
      %s656 = sshll.u32 [#allocation10], 4
      %s657 = int_to_ptr.vmem [resolvable:$true] %s656
      %659 = dma.vmem_to_hbm [thread:$0]  %s657, 128, %s6, [#allocation6]
    $region37: #{tpu_custom_call.1} parent=1 // pred_fallthru
      _
    // Predicated region
    $region38: #{tpu_custom_call.1} parent=1 // pred_check
      _
    $region39: #{tpu_custom_call.1} parent=1 // pred_check_branch
      %661 = sbr.rel (0) target = $region41
    $region40: #{tpu_custom_call.1} parent=1 // pred_region
      %662 = dma.done [#allocation6], 128
    $region41: #{tpu_custom_call.1} parent=1 // pred_fallthru
      _
    %663 = vsyncpa [#allocation5], 1
    %664 = vsyncpa [#allocation8], 1
    %665 = vsyncpa [#allocation6], 1

</llo_original>
